<compile_context>
chip_gen: v5e
topology: v5e:2x2
jax: 0.10.0
libtpu: 0.0.40
codegen_flags: <defaults>
</compile_context>

<pallas_src>
import functools

import jax
import jax.numpy as jnp
import numpy as np
from jax.experimental import pallas as pl
from jax.experimental.pallas import tpu as pltpu


def _hetero_conv_kernel(tile_type_ref,   # (n_tiles,) int32 SMEM (prefetch)
                        tile_act_ref,    # (n_tiles,) int32 SMEM (prefetch)
                        a_ref,           # (TM, TK)   int8  adjacency tile
                        xw_ref,          # (1, TK, 4F) bf16 projected features
                        out_ref):        # (TM, 4F)   f32   resident output
    i = pl.program_id(0)
    k = pl.program_id(1)

    @pl.when(k == 0)
    def _init():
        out_ref[...] = jnp.zeros_like(out_ref)

    # Skip MXU work for padding tiles and for node types whose in-subgraph has
    # zero edges (mirrors `if rel_data.num_edges == 0: continue`).
    @pl.when(tile_act_ref[i] > 0)
    def _accumulate():
        a = a_ref[...].astype(jnp.bfloat16)          # int8 -> bf16 upcast
        out_ref[...] += jnp.dot(a, xw_ref[0],
                                preferred_element_type=jnp.float32)


@functools.partial(jax.jit, static_argnames=("tm", "tk"))
def hetero_vertex_conv(x, vec, edges, type_id, Ws, Wv, bs, *, tm=512, tk=512):
    """HeteroVertexConv forward.

    x       : (N, F)     scalar node features
    vec     : (N, 3, F)  vector node features
    edges   : (N, N)     dst-major adjacency counts (edges[i, j] = #edges j->i)
    type_id : (N,)       node type index in [0, T)
    Ws, Wv  : (T, F, F)  per-type scalar / vector projection weights
    bs      : (T, F)     per-type scalar bias
    returns (x_out (N, F), vec_out (N, 3, F))
    """
    N, F = x.shape
    T = Ws.shape[0]
    assert tm % 32 == 0 and tk % 128 == 0, "tile alignment (int8 / lane rules)"
    assert N % tk == 0, "source axis must tile evenly"
    assert F % 128 == 0, "keep output slabs lane-dense (F multiple of 128)"
    f32 = jnp.float32
    i32 = jnp.int32
    fw = 4 * F

    # --- per-type in-subgraph edge counts (single pass over `edges`) --------
    row_deg = jnp.sum(edges.astype(i32), axis=1)                      # (N,)
    counts = jnp.zeros((T,), i32).at[type_id].add(row_deg)            # (T,)
    has_edges = counts > 0

    # --- sort dst nodes by type, pad each type segment to a tile multiple ---
    num_row_tiles = (N + tm - 1) // tm + T - 1        # static upper bound
    n_pad = num_row_tiles * tm

    order = jnp.argsort(type_id)                                      # (N,)
    sorted_types = type_id[order]
    n_per_type = jnp.sum(type_id[:, None] == jnp.arange(T)[None, :], axis=0)
    tiles_per_type = (n_per_type + tm - 1) // tm
    seg_start_rows = (jnp.cumsum(tiles_per_type) - tiles_per_type) * tm
    type_start_sorted = jnp.cumsum(n_per_type) - n_per_type
    within = jnp.arange(N) - type_start_sorted[sorted_types]
    padded_row = seg_start_rows[sorted_types] + within                # (N,)

    pad_to_orig = jnp.zeros((n_pad,), i32).at[padded_row].set(order.astype(i32))
    pad_is_real = jnp.zeros((n_pad,), bool).at[padded_row].set(True)
    node_to_pad = jnp.zeros((N,), i32).at[order].set(padded_row.astype(i32))

    # Adjacency in dst-type-sorted padded row order, stored as int8.
    edges_pad = jnp.where(pad_is_real[:, None],
                          edges[pad_to_orig], 0).astype(jnp.int8)     # (n_pad, N)

    # Per-tile type table + activity flags (scalar prefetch -> SMEM).
    pad_types = jnp.zeros((n_pad,), i32).at[padded_row].set(sorted_types.astype(i32))
    tile_type = pad_types[::tm]                                       # (n_tiles,)
    actual_tiles = jnp.sum(tiles_per_type)
    tile_active = (jnp.logical_and(jnp.arange(num_row_tiles) < actual_tiles,
                                   counts[tile_type] > 0)).astype(i32)

    # --- per-type feature projection done once: (A@X)@W == A@(X@W) ----------
    xw_s = jnp.einsum("nf,tfg->tng", x, Ws)                           # (T, N, F)
    xw_v = jnp.einsum("ncf,tfg->tncg", vec, Wv).reshape(T, N, 3 * F)  # (T, N, 3F)
    xw = jnp.concatenate([xw_s, xw_v], axis=-1).astype(jnp.bfloat16)  # (T, N, 4F)

    grid = (num_row_tiles, N // tk)

    out_pad = pl.pallas_call(
        _hetero_conv_kernel,
        out_shape=jax.ShapeDtypeStruct((n_pad, fw), f32),
        grid_spec=pltpu.PrefetchScalarGridSpec(
            num_scalar_prefetch=2,
            grid=grid,
            in_specs=[
                pl.BlockSpec((tm, tk), lambda i, k, tt, act: (i, k)),
                pl.BlockSpec((1, tk, fw), lambda i, k, tt, act: (tt[i], k, 0)),
            ],
            out_specs=pl.BlockSpec((tm, fw), lambda i, k, tt, act: (i, 0)),
        ),
        compiler_params=pltpu.CompilerParams(
            dimension_semantics=("parallel", "arbitrary"),
        ),
    )(tile_type, tile_active, edges_pad, xw)

    # Gather back to original node order; add the (edge-count gated) bias.
    out_nodes = out_pad[node_to_pad]                                  # (N, 4F)
    bias_s = jnp.where(has_edges[type_id][:, None], bs[type_id], 0.0)
    x_out = out_nodes[:, :F] + bias_s
    vec_out = out_nodes[:, F:].reshape(N, 3, F)
    return x_out, vec_out


if __name__ == "__main__":
    key = jax.random.PRNGKey(0)
    N, F, T = 256, 128, 3
    k1, k2, k3, k4, k5, k6, k7 = jax.random.split(key, 7)

    type_id = jax.random.randint(k1, (N,), 0, T)

    # Random sparse-ish edges; force the in-subgraph of type T-1 to be empty
    # to exercise the "skip module when the subgraph has zero edges" path.
    edges = (jax.random.uniform(k2, (N, N)) < 0.05)
    edges = jnp.where((type_id == T - 1)[:, None], False, edges)
    edges = edges.astype(jnp.int8)                                    # (N, N)

    x = jax.random.normal(k3, (N, F), jnp.float32)
    vec = jax.random.normal(k4, (N, 3, F), jnp.float32)
    Ws = jax.random.normal(k5, (T, F, F), jnp.float32) / jnp.sqrt(F)
    Wv = jax.random.normal(k6, (T, F, F), jnp.float32) / jnp.sqrt(F)
    bs = jax.random.normal(k7, (T, F), jnp.float32)

    # Small tiles for the tiny demo shapes; for large N use the 512/512 defaults.
    x_out, vec_out = hetero_vertex_conv(x, vec, edges, type_id, Ws, Wv, bs,
                                        tm=128, tk=256)
    jax.block_until_ready((x_out, vec_out))

    # Pure-JAX reference mirroring the original module structure.
    edges_f = edges.astype(jnp.float32)
    x_ref = jnp.zeros_like(x)
    vec_ref = jnp.zeros_like(vec)
    for t in range(T):
        nid = type_id == t
        At = jnp.where(nid[:, None], edges_f, 0.0)   # in-subgraph of type-t dsts
        if float(At.sum()) == 0.0:
            continue                                 # empty subgraph -> skip
        srst = (At @ x) @ Ws[t] + bs[t]
        vrst = jnp.einsum("nm,mcf,fg->ncg", At, vec, Wv[t])
        x_ref = x_ref + jnp.where(nid[:, None], srst, 0.0)
        vec_ref = vec_ref + jnp.where(nid[:, None, None], vrst, 0.0)

    np.testing.assert_allclose(np.asarray(x_out), np.asarray(x_ref),
                               rtol=5e-2, atol=1e-1)
    np.testing.assert_allclose(np.asarray(vec_out), np.asarray(vec_ref),
                               rtol=5e-2, atol=1e-1)
    print("KERNEL_OK")
</pallas_src>

<mosaic_0001>
module attributes {stable_mosaic.version = 11 : i64} {
  func.func @_hetero_conv_kernel(%arg0: i32, %arg1: i32, %arg2: memref<4xi32, #tpu.memory_space<smem>>, %arg3: memref<4xi32, #tpu.memory_space<smem>>, %arg4: memref<128x256xi8, #tpu.memory_space<vmem>>, %arg5: memref<1x256x512xbf16, #tpu.memory_space<vmem>>, %arg6: memref<128x512xf32, #tpu.memory_space<vmem>>) attributes {dimension_semantics = [#tpu.dimension_semantics<parallel>, #tpu.dimension_semantics<arbitrary>], iteration_bounds = array<i64: 4, 1>, scalar_prefetch = 2 : i64, scratch_operands = 0 : i64, tpu.core_type = #tpu.core_type<tc>, window_params = [{transform_indices = @transform_0, window_bounds = array<i64: 128, 256>}, {transform_indices = @transform_1, window_bounds = array<i64: 1, 256, 512>}, {transform_indices = @transform_2, window_bounds = array<i64: 128, 512>}]} {
    %c0_i32 = arith.constant 0 : i32
    %0 = arith.cmpi eq, %arg1, %c0_i32 : i32
    %1 = arith.extui %0 : i1 to i32
    %c0_i32_0 = arith.constant 0 : i32
    %2 = arith.cmpi ne, %1, %c0_i32_0 : i32
    scf.if %2 {
      %cst = arith.constant 0.000000e+00 : f32
      %8 = vector.broadcast %cst : f32 to vector<128x512xf32>
      %c0 = arith.constant 0 : index
      %c0_3 = arith.constant 0 : index
      %9 = vector.load %arg6[%c0, %c0_3] : memref<128x512xf32, #tpu.memory_space<vmem>>, vector<128x512xf32>
      tpu.vector_store %arg6[%c0, %c0_3], %8 {strides = array<i32>} : memref<128x512xf32, #tpu.memory_space<vmem>>, vector<128x512xf32>,
    } else {
    }
    %3 = arith.index_cast %arg0 : i32 to index
    %4 = memref.load %arg3[%3] : memref<4xi32, #tpu.memory_space<smem>>
    %c0_i32_1 = arith.constant 0 : i32
    %5 = arith.cmpi sgt, %4, %c0_i32_1 : i32
    %6 = arith.extui %5 : i1 to i32
    %c0_i32_2 = arith.constant 0 : i32
    %7 = arith.cmpi ne, %6, %c0_i32_2 : i32
    scf.if %7 {
      %c0 = arith.constant 0 : index
      %c0_3 = arith.constant 0 : index
      %8 = vector.load %arg4[%c0, %c0_3] : memref<128x256xi8, #tpu.memory_space<vmem>>, vector<128x256xi8>
      %9 = arith.sitofp %8 : vector<128x256xi8> to vector<128x256xbf16>
      %c0_4 = arith.constant 0 : index
      %c0_5 = arith.constant 0 : index
      %10 = vector.load %arg6[%c0_4, %c0_5] : memref<128x512xf32, #tpu.memory_space<vmem>>, vector<128x512xf32>
      %c0_6 = arith.constant 0 : index
      %c0_7 = arith.constant 0 : index
      %c0_8 = arith.constant 0 : index
      %11 = vector.load %arg5[%c0_6, %c0_7, %c0_8] : memref<1x256x512xbf16, #tpu.memory_space<vmem>>, vector<1x256x512xbf16>
      %12 = vector.shape_cast %11 : vector<1x256x512xbf16> to vector<256x512xbf16>
      %cst = arith.constant dense<0.000000e+00> : vector<128x512xf32>
      %13 = tpu.matmul %9, %12, %cst {dimension_numbers = #tpu.dot_dimension_numbers<[1], [0], [0], [1], [0, 0, 1, 1], [], []>} : vector<128x256xbf16>, vector<256x512xbf16>, vector<128x512xf32> -> vector<128x512xf32>
      %14 = arith.addf %10, %13 : vector<128x512xf32>
      %c0_9 = arith.constant 0 : index
      %c0_10 = arith.constant 0 : index
      %15 = vector.load %arg6[%c0_9, %c0_10] : memref<128x512xf32, #tpu.memory_space<vmem>>, vector<128x512xf32>
      tpu.vector_store %arg6[%c0_9, %c0_10], %14 {strides = array<i32>} : memref<128x512xf32, #tpu.memory_space<vmem>>, vector<128x512xf32>,
    } else {
    }
    return
  }
  func.func @transform_0(%arg0: i32, %arg1: i32, %arg2: memref<4xi32, #tpu.memory_space<smem>>, %arg3: memref<4xi32, #tpu.memory_space<smem>>) -> (i32, i32) {
    %c0_i32 = arith.constant 0 : i32
    return %arg0, %arg1 : i32, i32
  }
  func.func @transform_1(%arg0: i32, %arg1: i32, %arg2: memref<4xi32, #tpu.memory_space<smem>>, %arg3: memref<4xi32, #tpu.memory_space<smem>>) -> (i32, i32, i32) {
    %0 = arith.index_cast %arg0 : i32 to index
    %1 = memref.load %arg2[%0] : memref<4xi32, #tpu.memory_space<smem>>
    %c0_i32 = arith.constant 0 : i32
    %c0_i32_0 = arith.constant 0 : i32
    return %1, %arg1, %c0_i32 : i32, i32, i32
  }
  func.func @transform_2(%arg0: i32, %arg1: i32, %arg2: memref<4xi32, #tpu.memory_space<smem>>, %arg3: memref<4xi32, #tpu.memory_space<smem>>) -> (i32, i32) {
    %c0_i32 = arith.constant 0 : i32
    %c0_i32_0 = arith.constant 0 : i32
    return %arg0, %c0_i32 : i32, i32
  }
}

</mosaic_0001>

<llo_original>
// kernel: hetero_vertex_conv.1
$region0: #{hetero_vertex_conv.1}
  #allocation0 [shape = 'u32[]', space=smem, size = 0x4, offset = 0x4, fixed_abs, tag = 'smem constant byte address 0x4 - core index']
  #allocation1 [shape = 'u32[72,128]{1,0:T(1,128)}', space=vmem, size = 0x9000, scoped, tag = 'internal scratch']
  #allocation2 [shape = 's32[1]{0}', space=sflag, size = 0x4, scoped, tag = 'scoped memory for hetero_vertex_conv.1']
  #allocation3 [shape = 'u8[512]{0}', space=smem, size = 0x200, scoped, tag = 'prefetched SMEM operand 0']
  #allocation4 [shape = 'u8[512]{0}', space=smem, size = 0x200, scoped, tag = 'prefetched SMEM operand 1']
  %s0 = inlined_call_operand.vmem [shape: s32[4], index: 0, kind: input, shape index: {}]
  %s1 = inlined_call_operand.vmem [shape: s32[4], index: 1, kind: input, shape index: {}]
  %s2 = inlined_call_operand.vmem [shape: s8[512,256], index: 2, kind: input, shape index: {}]
  %s3 = inlined_call_operand.vmem [shape: bf16[3,256,512], index: 3, kind: input, shape index: {}]
  %s4 = inlined_call_operand.vmem [shape: f32[512,512], index: 4, kind: output, shape index: {}]
  %s5 = sld [smem:[#allocation0]]
  $region49: #{hetero_vertex_conv.1} parent=0
    _
  %s7 = ssub.s32 1, %s5
  %s8 = scalar_select 0, %s7, %s5
  %s10 = sshll.u32 %s0, 4
  %s11 = int_to_ptr.vmem [resolvable:$true] %s10
  %13 = dma.vmem_to_smem %s11, 16, [#allocation3], [#allocation2]
  %s15 = sshll.u32 %s1, 4
  %s16 = int_to_ptr.vmem [resolvable:$true] %s15
  %18 = dma.vmem_to_smem %s16, 16, [#allocation4], [#allocation2]
  %20 = dma.done [#allocation2], 32
  %21 = sfence
  loop: start=0, step=1, limit=6
  $region2: #{hetero_vertex_conv.1} parent=0 // loop_pre_header
    _
  $region3: #{hetero_vertex_conv.1} parent=0 // loop_header
    %s23 = sphi 0, %s27
    %p24 = scmp.ge.s32.totalorder %s23, 6
    %s30 = sphi 0, %s42
    %s31 = sphi 0, %s38
    %s32 = sphi 0, %s30
    %s33 = sphi 0, %s31
    %s34 = sphi 0, %s32
    %s35 = sphi 0, %s33
    %s47 = sphi 0, %s49
    %s50 = sphi 0, %s47
    %s51 = sphi 0, %s50
    %s67 = sphi 0, %s51
    %s77 = sphi 0, %s79
    %s80 = sphi 0, %s77
    %s81 = sphi 0, %s80
    %s97 = sphi 0, %s81
    %s103 = sphi 0, %s105
    %s106 = sphi 0, %s103
    %s107 = sphi 0, %s106
    %s123 = sphi 0, %s107
  $region4: #{hetero_vertex_conv.1} parent=0 // loop_header_branch
    %26 = sbr.rel (%p24) target = $region8
  $region5: #{hetero_vertex_conv.1} parent=0 // loop_body
    %s28 = ssub.s32 %s23, 1
    %s29 = ssub.s32 %s23, 2
    %s36 = sadd.s32 1, %s31
    %p37 = scmp.ge.s32.totalorder %s36, 1
    %s38 = scalar_select %p37, 0, %s36
    %s39 = sadd.s32 1, %s30
    %s40 = scalar_select %p37, %s39, %s30
    %p41 = scmp.ge.s32.totalorder %s40, 4
    %s42 = scalar_select %p41, 0, %s40
    %s43 = ssub.s32 %s30, %s42
    %s44 = ssub.s32 %s31, %s38
    %s45 = sor.u32 %s43, %s44
    %p46 = scmp.eq.s32.totalorder %s45, 0
    %s48 = sadd.s32 %s47, 1
    %s49 = scalar_select %p46, %s47, %s48
    %p52 = pneg %p46
    %p53 = scmp.eq.s32.totalorder %s23, 3
    %p54 = por %p52, %p53
    %p55 = scmp.ne.s32.totalorder %s47, %s50
    %p56 = scmp.eq.s32.totalorder %s23, 0
    %p57 = por %p55, %p56
    %p58 = scmp.ne.s32.totalorder %s47, %s50
    %p59 = scmp.eq.s32.totalorder %s28, 3
    %p60 = por %p58, %p59
    %p61 = scmp.ne.s32.totalorder %s50, %s51
    %p62 = scmp.eq.s32.totalorder %s28, 0
    %p63 = por %p61, %p62
    %p64 = scmp.ne.s32.totalorder %s50, %s51
    %p65 = scmp.eq.s32.totalorder %s29, 3
    %p66 = por %p64, %p65
    %p68 = scmp.ne.s32.totalorder %s51, %s67
    %p69 = scmp.eq.s32.totalorder %s29, 0
    %p70 = por %p68, %p69
    %s71 = sld [smem:[#allocation3 + %s30]]
    %s72 = sld [smem:[#allocation3 + %s42]]
    %s73 = ssub.s32 %s71, %s72
    %s74 = ssub.s32 %s31, %s38
    %s75 = sor.u32 %s73, %s74
    %p76 = scmp.eq.s32.totalorder %s75, 0
    %s78 = sadd.s32 %s77, 1
    %s79 = scalar_select %p76, %s77, %s78
    %p82 = pneg %p76
    %p83 = scmp.eq.s32.totalorder %s23, 3
    %p84 = por %p82, %p83
    %p85 = scmp.ne.s32.totalorder %s77, %s80
    %p86 = scmp.eq.s32.totalorder %s23, 0
    %p87 = por %p85, %p86
    %p88 = scmp.ne.s32.totalorder %s77, %s80
    %p89 = scmp.eq.s32.totalorder %s28, 3
    %p90 = por %p88, %p89
    %p91 = scmp.ne.s32.totalorder %s80, %s81
    %p92 = scmp.eq.s32.totalorder %s28, 0
    %p93 = por %p91, %p92
    %p94 = scmp.ne.s32.totalorder %s80, %s81
    %p95 = scmp.eq.s32.totalorder %s29, 3
    %p96 = por %p94, %p95
    %p98 = scmp.ne.s32.totalorder %s81, %s97
    %p99 = scmp.eq.s32.totalorder %s29, 0
    %p100 = por %p98, %p99
    %s101 = ssub.s32 %s30, %s42
    %p102 = scmp.eq.s32.totalorder %s101, 0
    %s104 = sadd.s32 %s103, 1
    %s105 = scalar_select %p102, %s103, %s104
    %p108 = pneg %p102
    %p109 = scmp.eq.s32.totalorder %s23, 3
    %p110 = por %p108, %p109
    %p111 = scmp.ne.s32.totalorder %s103, %s106
    %p112 = scmp.eq.s32.totalorder %s23, 0
    %p113 = por %p111, %p112
    %p114 = scmp.ne.s32.totalorder %s103, %s106
    %p115 = scmp.eq.s32.totalorder %s28, 3
    %p116 = por %p114, %p115
    %p117 = scmp.ne.s32.totalorder %s106, %s107
    %p118 = scmp.eq.s32.totalorder %s28, 0
    %p119 = por %p117, %p118
    %p120 = scmp.ne.s32.totalorder %s106, %s107
    %p121 = scmp.eq.s32.totalorder %s29, 3
    %p122 = por %p120, %p121
    %p124 = scmp.ne.s32.totalorder %s107, %s123
    %p125 = scmp.eq.s32.totalorder %s29, 0
    %p126 = por %p124, %p125
    %p127 = scmp.le.s32.totalorder 1, %s23
    %p128 = scmp.lt.s32.totalorder %s23, 5
    %p129 = pnand %p127, %p128
    %p130 = pneg %p129
    // Predicated region
    $region9: #{hetero_vertex_conv.1} parent=5 // pred_check
      _
    $region10: #{hetero_vertex_conv.1} parent=5 // pred_check_branch
      %132 = sbr.rel (%p129) target = $region12
    $region11: #{hetero_vertex_conv.1} parent=5 // pred_region
      %s133 = ssub.s32 %s23, 1
    $region12: #{hetero_vertex_conv.1} parent=5 // pred_fallthru
      _
    %p134 = scmp.lt.s32.totalorder %s23, 4
    // Predicated region
    $region13: #{hetero_vertex_conv.1} parent=5 // pred_check
      %p135 = pneg %p134
    $region14: #{hetero_vertex_conv.1} parent=5 // pred_check_branch
      %137 = sbr.rel (%p135) target = $region16
    $region15: #{hetero_vertex_conv.1} parent=5 // pred_region
      // Predicated region
      $region17: #{hetero_vertex_conv.1} parent=15 // pred_check
        %p138 = pneg %p57
      $region18: #{hetero_vertex_conv.1} parent=15 // pred_check_branch
        %140 = sbr.rel (%p138) target = $region20
      $region19: #{hetero_vertex_conv.1} parent=15 // pred_region
        %s141 = smul.u32 4, %s30
        %s142 = smul.u32 2, %s31
        %p143 = scmp.lt.s32.totalorder %s141, 15
        %s144 = scalar_select %p143, %s141, 15
        %p145 = scmp.lt.s32.totalorder %s142, 1
        %s146 = scalar_select %p145, %s142, 1
        %s147 = smul.addr %s144, 2
        %s148 = sadd.s32 %s146, %s147
        %s149 = smul.addr %s148, 8
        %s150 = scalar_lea.vmem %s2, %s149
        %s151 = smul.u32 4, %s30
        %s152 = smul.u32 2, %s31
      $region20: #{hetero_vertex_conv.1} parent=15 // pred_fallthru
        _
      // Predicated region
      $region21: #{hetero_vertex_conv.1} parent=15 // pred_check
        %p153 = pneg %p87
      $region22: #{hetero_vertex_conv.1} parent=15 // pred_check_branch
        %155 = sbr.rel (%p153) target = $region24
      $region23: #{hetero_vertex_conv.1} parent=15 // pred_region
        %s156 = sld [smem:[#allocation3 + %s30]]
        %s157 = smul.u32 32, %s31
        %p158 = scmp.lt.s32.totalorder %s156, 2
        %s159 = scalar_select %p158, %s156, 2
        %p160 = scmp.lt.s32.totalorder %s157, 31
        %s161 = scalar_select %p160, %s157, 31
        %s162 = smul.addr %s161, 4
        %s163 = smul.addr %s159, 128
        %s164 = sadd.s32 %s162, %s163
        %s165 = smul.addr %s164, 4
        %s166 = scalar_lea.vmem %s3, %s165
        %s167 = sld [smem:[#allocation3 + %s30]]
        %s168 = smul.u32 32, %s31
      $region24: #{hetero_vertex_conv.1} parent=15 // pred_fallthru
        _
    $region16: #{hetero_vertex_conv.1} parent=5 // pred_fallthru
      _
    %p169 = scmp.le.s32.totalorder 1, %s23
    %p170 = scmp.lt.s32.totalorder %s23, 5
    %p171 = pnand %p169, %p170
    %p172 = pneg %p171
    // Predicated region
    $region25: #{hetero_vertex_conv.1} parent=5 // pred_check
      _
    $region26: #{hetero_vertex_conv.1} parent=5 // pred_check_branch
      %174 = sbr.rel (%p171) target = $region28
    $region27: #{hetero_vertex_conv.1} parent=5 // pred_region
      %s175 = ssub.s32 %s23, 1
      %s176 = smul.u32 4, %s32
      %s177 = smul.u32 2, %s33
      %p178 = scmp.lt.s32.totalorder %s176, 15
      %s179 = scalar_select %p178, %s176, 15
      %p180 = scmp.lt.s32.totalorder %s177, 1
      %s181 = scalar_select %p180, %s177, 1
      %s182 = smul.addr %s179, 2
      %s183 = sadd.s32 %s181, %s182
      %s184 = smul.addr %s183, 8
      %s185 = scalar_lea.vmem %s2, %s184
      %p186 = pneg %p63
      %p187 = pneg %p60
      %s188 = sld [smem:[#allocation3 + %s32]]
      %s189 = smul.u32 32, %s33
      %p190 = scmp.lt.s32.totalorder %s188, 2
      %s191 = scalar_select %p190, %s188, 2
      %p192 = scmp.lt.s32.totalorder %s189, 31
      %s193 = scalar_select %p192, %s189, 31
      %s194 = smul.addr %s193, 4
      %s195 = smul.addr %s191, 128
      %s196 = sadd.s32 %s194, %s195
      %s197 = smul.addr %s196, 4
      %s198 = scalar_lea.vmem %s3, %s197
      %p199 = pneg %p93
      %p200 = pneg %p90
      %p201 = pneg %p119
      %p202 = pneg %p116
      %s203 = smul.u32 16, %s32
      %p204 = scmp.lt.s32.totalorder %s203, 63
      %s205 = scalar_select %p204, %s203, 63
      %s206 = smul.addr %s205, 4
      %s207 = smul.addr %s206, 8
      %s208 = scalar_lea.vmem %s4, %s207
      %s209 = smul.u32 4, %s32
      %s210 = smul.u32 2, %s33
      %p211 = scmp.lt.s32.totalorder %s209, 15
      %s212 = scalar_select %p211, %s209, 15
      %p213 = scmp.lt.s32.totalorder %s210, 1
      %s214 = scalar_select %p213, %s210, 1
      %s215 = smul.addr %s212, 2
      %s216 = sadd.s32 %s214, %s215
      %s217 = smul.addr %s216, 8
      %s218 = scalar_lea.vmem %s2, %s217
      %s219 = smul.u32 4, %s32
      %s220 = smul.u32 2, %s33
      %s221 = sld [smem:[#allocation3 + %s32]]
      %s222 = smul.u32 32, %s33
      %p223 = scmp.lt.s32.totalorder %s221, 2
      %s224 = scalar_select %p223, %s221, 2
      %p225 = scmp.lt.s32.totalorder %s222, 31
      %s226 = scalar_select %p225, %s222, 31
      %s227 = smul.addr %s226, 4
      %s228 = smul.addr %s224, 128
      %s229 = sadd.s32 %s227, %s228
      %s230 = smul.addr %s229, 4
      %s231 = scalar_lea.vmem %s3, %s230
      %s232 = sld [smem:[#allocation3 + %s32]]
      %s233 = smul.u32 32, %s33
      %s234 = smul.u32 16, %s32
      %p235 = scmp.lt.s32.totalorder %s234, 63
      %s236 = scalar_select %p235, %s234, 63
      %s237 = smul.addr %s236, 4
      %s238 = smul.addr %s237, 8
      %s239 = scalar_lea.vmem %s4, %s238
      %s240 = smul.u32 16, %s32
      %p241 = scmp.eq.s32.totalorder %s33, 0
      // Predicated region
      $region29: #{hetero_vertex_conv.1} parent=27 // pred_check
        %p242 = pneg %p241
      $region30: #{hetero_vertex_conv.1} parent=27 // pred_check_branch
        %244 = sbr.rel (%p242) target = $region32
      $region31: #{hetero_vertex_conv.1} parent=27 // pred_region
        %245 = vst [vmem:[%s239] sm:$0xff] 0.0
        %246 = vst [vmem:[%s239 + $0x8] sm:$0xff] 0.0
        %247 = vst [vmem:[%s239 + $0x10] sm:$0xff] 0.0
        %248 = vst [vmem:[%s239 + $0x18] sm:$0xff] 0.0
        %249 = vst [vmem:[%s239 + $0x20] sm:$0xff] 0.0
        %250 = vst [vmem:[%s239 + $0x28] sm:$0xff] 0.0
        %251 = vst [vmem:[%s239 + $0x30] sm:$0xff] 0.0
        %252 = vst [vmem:[%s239 + $0x38] sm:$0xff] 0.0
        %253 = vst [vmem:[%s239 + $0x40] sm:$0xff] 0.0
        %254 = vst [vmem:[%s239 + $0x48] sm:$0xff] 0.0
        %255 = vst [vmem:[%s239 + $0x50] sm:$0xff] 0.0
        %256 = vst [vmem:[%s239 + $0x58] sm:$0xff] 0.0
        %257 = vst [vmem:[%s239 + $0x60] sm:$0xff] 0.0
        %258 = vst [vmem:[%s239 + $0x68] sm:$0xff] 0.0
        %259 = vst [vmem:[%s239 + $0x70] sm:$0xff] 0.0
        %260 = vst [vmem:[%s239 + $0x78] sm:$0xff] 0.0
        %261 = vst [vmem:[%s239 + $0x80] sm:$0xff] 0.0
        %262 = vst [vmem:[%s239 + $0x88] sm:$0xff] 0.0
        %263 = vst [vmem:[%s239 + $0x90] sm:$0xff] 0.0
        %264 = vst [vmem:[%s239 + $0x98] sm:$0xff] 0.0
        %265 = vst [vmem:[%s239 + $0xa0] sm:$0xff] 0.0
        %266 = vst [vmem:[%s239 + $0xa8] sm:$0xff] 0.0
        %267 = vst [vmem:[%s239 + $0xb0] sm:$0xff] 0.0
        %268 = vst [vmem:[%s239 + $0xb8] sm:$0xff] 0.0
        %269 = vst [vmem:[%s239 + $0xc0] sm:$0xff] 0.0
        %270 = vst [vmem:[%s239 + $0xc8] sm:$0xff] 0.0
        %271 = vst [vmem:[%s239 + $0xd0] sm:$0xff] 0.0
        %272 = vst [vmem:[%s239 + $0xd8] sm:$0xff] 0.0
        %273 = vst [vmem:[%s239 + $0xe0] sm:$0xff] 0.0
        %274 = vst [vmem:[%s239 + $0xe8] sm:$0xff] 0.0
        %275 = vst [vmem:[%s239 + $0xf0] sm:$0xff] 0.0
        %276 = vst [vmem:[%s239 + $0xf8] sm:$0xff] 0.0
        %277 = vst [vmem:[%s239 + $0x100] sm:$0xff] 0.0
        %278 = vst [vmem:[%s239 + $0x108] sm:$0xff] 0.0
        %279 = vst [vmem:[%s239 + $0x110] sm:$0xff] 0.0
        %280 = vst [vmem:[%s239 + $0x118] sm:$0xff] 0.0
        %281 = vst [vmem:[%s239 + $0x120] sm:$0xff] 0.0
        %282 = vst [vmem:[%s239 + $0x128] sm:$0xff] 0.0
        %283 = vst [vmem:[%s239 + $0x130] sm:$0xff] 0.0
        %284 = vst [vmem:[%s239 + $0x138] sm:$0xff] 0.0
        %285 = vst [vmem:[%s239 + $0x140] sm:$0xff] 0.0
        %286 = vst [vmem:[%s239 + $0x148] sm:$0xff] 0.0
        %287 = vst [vmem:[%s239 + $0x150] sm:$0xff] 0.0
        %288 = vst [vmem:[%s239 + $0x158] sm:$0xff] 0.0
        %289 = vst [vmem:[%s239 + $0x160] sm:$0xff] 0.0
        %290 = vst [vmem:[%s239 + $0x168] sm:$0xff] 0.0
        %291 = vst [vmem:[%s239 + $0x170] sm:$0xff] 0.0
        %292 = vst [vmem:[%s239 + $0x178] sm:$0xff] 0.0
        %293 = vst [vmem:[%s239 + $0x180] sm:$0xff] 0.0
        %294 = vst [vmem:[%s239 + $0x188] sm:$0xff] 0.0
        %295 = vst [vmem:[%s239 + $0x190] sm:$0xff] 0.0
        %296 = vst [vmem:[%s239 + $0x198] sm:$0xff] 0.0
        %297 = vst [vmem:[%s239 + $0x1a0] sm:$0xff] 0.0
        %298 = vst [vmem:[%s239 + $0x1a8] sm:$0xff] 0.0
        %299 = vst [vmem:[%s239 + $0x1b0] sm:$0xff] 0.0
        %300 = vst [vmem:[%s239 + $0x1b8] sm:$0xff] 0.0
        %301 = vst [vmem:[%s239 + $0x1c0] sm:$0xff] 0.0
        %302 = vst [vmem:[%s239 + $0x1c8] sm:$0xff] 0.0
        %303 = vst [vmem:[%s239 + $0x1d0] sm:$0xff] 0.0
        %304 = vst [vmem:[%s239 + $0x1d8] sm:$0xff] 0.0
        %305 = vst [vmem:[%s239 + $0x1e0] sm:$0xff] 0.0
        %306 = vst [vmem:[%s239 + $0x1e8] sm:$0xff] 0.0
        %307 = vst [vmem:[%s239 + $0x1f0] sm:$0xff] 0.0
        %308 = vst [vmem:[%s239 + $0x1f8] sm:$0xff] 0.0
      $region32: #{hetero_vertex_conv.1} parent=27 // pred_fallthru
        _
      %s309 = sld [smem:[#allocation4 + %s32]]
      %p310 = scmp.gt.s32.totalorder %s309, 0
      // Predicated region
      $region33: #{hetero_vertex_conv.1} parent=27 // pred_check
        %p311 = pneg %p310
      $region34: #{hetero_vertex_conv.1} parent=27 // pred_check_branch
        %313 = sbr.rel (%p311) target = $region36
      $region35: #{hetero_vertex_conv.1} parent=27 // pred_region
        %v314 = vld [vmem:[%s218] sm:$0xff]
        %v315 = vld [vmem:[%s218 + $0x8] sm:$0xff]
        %v316 = vld [vmem:[%s218 + $0x10] sm:$0xff]
        %v317 = vld [vmem:[%s218 + $0x18] sm:$0xff]
        %v318 = vld [vmem:[%s218 + $0x20] sm:$0xff]
        %v319 = vld [vmem:[%s218 + $0x28] sm:$0xff]
        %v320 = vld [vmem:[%s218 + $0x30] sm:$0xff]
        %v321 = vld [vmem:[%s218 + $0x38] sm:$0xff]
        %v322 = vunpack.c.0.s8 %v314
        %v323 = vunpack.c.0.s8 %v315
        %v324 = vunpack.c.1.s8 %v314
        %v325 = vunpack.c.1.s8 %v315
        %v326 = vunpack.c.2.s8 %v314
        %v327 = vunpack.c.2.s8 %v315
        %v328 = vunpack.c.3.s8 %v314
        %v329 = vunpack.c.3.s8 %v315
        %v330 = vunpack.c.0.s8 %v316
        %v331 = vunpack.c.0.s8 %v317
        %v332 = vunpack.c.1.s8 %v316
        %v333 = vunpack.c.1.s8 %v317
        %v334 = vunpack.c.2.s8 %v316
        %v335 = vunpack.c.2.s8 %v317
        %v336 = vunpack.c.3.s8 %v316
        %v337 = vunpack.c.3.s8 %v317
        %v338 = vunpack.c.0.s8 %v318
        %v339 = vunpack.c.0.s8 %v319
        %v340 = vunpack.c.1.s8 %v318
        %v341 = vunpack.c.1.s8 %v319
        %v342 = vunpack.c.2.s8 %v318
        %v343 = vunpack.c.2.s8 %v319
        %v344 = vunpack.c.3.s8 %v318
        %v345 = vunpack.c.3.s8 %v319
        %v346 = vunpack.c.0.s8 %v320
        %v347 = vunpack.c.0.s8 %v321
        %v348 = vunpack.c.1.s8 %v320
        %v349 = vunpack.c.1.s8 %v321
        %v350 = vunpack.c.2.s8 %v320
        %v351 = vunpack.c.2.s8 %v321
        %v352 = vunpack.c.3.s8 %v320
        %v353 = vunpack.c.3.s8 %v321
        %v354 = vcvt.s32.f32 %v322
        %v355 = vcvt.s32.f32 %v323
        %v356 = vcvt.s32.f32 %v324
        %v357 = vcvt.s32.f32 %v325
        %v358 = vcvt.s32.f32 %v326
        %v359 = vcvt.s32.f32 %v327
        %v360 = vcvt.s32.f32 %v328
        %v361 = vcvt.s32.f32 %v329
        %v362 = vcvt.s32.f32 %v330
        %v363 = vcvt.s32.f32 %v331
        %v364 = vcvt.s32.f32 %v332
        %v365 = vcvt.s32.f32 %v333
        %v366 = vcvt.s32.f32 %v334
        %v367 = vcvt.s32.f32 %v335
        %v368 = vcvt.s32.f32 %v336
        %v369 = vcvt.s32.f32 %v337
        %v370 = vcvt.s32.f32 %v338
        %v371 = vcvt.s32.f32 %v339
        %v372 = vcvt.s32.f32 %v340
        %v373 = vcvt.s32.f32 %v341
        %v374 = vcvt.s32.f32 %v342
        %v375 = vcvt.s32.f32 %v343
        %v376 = vcvt.s32.f32 %v344
        %v377 = vcvt.s32.f32 %v345
        %v378 = vcvt.s32.f32 %v346
        %v379 = vcvt.s32.f32 %v347
        %v380 = vcvt.s32.f32 %v348
        %v381 = vcvt.s32.f32 %v349
        %v382 = vcvt.s32.f32 %v350
        %v383 = vcvt.s32.f32 %v351
        %v384 = vcvt.s32.f32 %v352
        %v385 = vcvt.s32.f32 %v353
        %v386 = vpack.c.bf16 %v356, %v354
        %v387 = vpack.c.bf16 %v357, %v355
        %v388 = vpack.c.bf16 %v360, %v358
        %v389 = vpack.c.bf16 %v361, %v359
        %v390 = vpack.c.bf16 %v364, %v362
        %v391 = vpack.c.bf16 %v365, %v363
        %v392 = vpack.c.bf16 %v368, %v366
        %v393 = vpack.c.bf16 %v369, %v367
        %v394 = vpack.c.bf16 %v372, %v370
        %v395 = vpack.c.bf16 %v373, %v371
        %v396 = vpack.c.bf16 %v376, %v374
        %v397 = vpack.c.bf16 %v377, %v375
        %v398 = vpack.c.bf16 %v380, %v378
        %v399 = vpack.c.bf16 %v381, %v379
        %v400 = vpack.c.bf16 %v384, %v382
        %v401 = vpack.c.bf16 %v385, %v383
        %v402 = vld [vmem:[%s239] sm:$0xff]
        %v403 = vld [vmem:[%s239 + $0x8] sm:$0xff]
        %v404 = vld [vmem:[%s239 + $0x10] sm:$0xff]
        %v405 = vld [vmem:[%s239 + $0x18] sm:$0xff]
        %v406 = vld [vmem:[%s239 + $0x20] sm:$0xff]
        %v407 = vld [vmem:[%s239 + $0x28] sm:$0xff]
        %v408 = vld [vmem:[%s239 + $0x30] sm:$0xff]
        %v409 = vld [vmem:[%s239 + $0x38] sm:$0xff]
        %v410 = vld [vmem:[%s239 + $0x40] sm:$0xff]
        %v411 = vld [vmem:[%s239 + $0x48] sm:$0xff]
        %v412 = vld [vmem:[%s239 + $0x50] sm:$0xff]
        %v413 = vld [vmem:[%s239 + $0x58] sm:$0xff]
        %v414 = vld [vmem:[%s239 + $0x60] sm:$0xff]
        %v415 = vld [vmem:[%s239 + $0x68] sm:$0xff]
        %v416 = vld [vmem:[%s239 + $0x70] sm:$0xff]
        %v417 = vld [vmem:[%s239 + $0x78] sm:$0xff]
        %v418 = vld [vmem:[%s239 + $0x80] sm:$0xff]
        %v419 = vld [vmem:[%s239 + $0x88] sm:$0xff]
        %v420 = vld [vmem:[%s239 + $0x90] sm:$0xff]
        %v421 = vld [vmem:[%s239 + $0x98] sm:$0xff]
        %v422 = vld [vmem:[%s239 + $0xa0] sm:$0xff]
        %v423 = vld [vmem:[%s239 + $0xa8] sm:$0xff]
        %v424 = vld [vmem:[%s239 + $0xb0] sm:$0xff]
        %v425 = vld [vmem:[%s239 + $0xb8] sm:$0xff]
        %v426 = vld [vmem:[%s239 + $0xc0] sm:$0xff]
        %v427 = vld [vmem:[%s239 + $0xc8] sm:$0xff]
        %v428 = vld [vmem:[%s239 + $0xd0] sm:$0xff]
        %v429 = vld [vmem:[%s239 + $0xd8] sm:$0xff]
        %v430 = vld [vmem:[%s239 + $0xe0] sm:$0xff]
        %v431 = vld [vmem:[%s239 + $0xe8] sm:$0xff]
        %v432 = vld [vmem:[%s239 + $0xf0] sm:$0xff]
        %v433 = vld [vmem:[%s239 + $0xf8] sm:$0xff]
        %v434 = vld [vmem:[%s239 + $0x100] sm:$0xff]
        %v435 = vld [vmem:[%s239 + $0x108] sm:$0xff]
        %v436 = vld [vmem:[%s239 + $0x110] sm:$0xff]
        %v437 = vld [vmem:[%s239 + $0x118] sm:$0xff]
        %v438 = vld [vmem:[%s239 + $0x120] sm:$0xff]
        %v439 = vld [vmem:[%s239 + $0x128] sm:$0xff]
        %v440 = vld [vmem:[%s239 + $0x130] sm:$0xff]
        %v441 = vld [vmem:[%s239 + $0x138] sm:$0xff]
        %v442 = vld [vmem:[%s239 + $0x140] sm:$0xff]
        %v443 = vld [vmem:[%s239 + $0x148] sm:$0xff]
        %v444 = vld [vmem:[%s239 + $0x150] sm:$0xff]
        %v445 = vld [vmem:[%s239 + $0x158] sm:$0xff]
        %v446 = vld [vmem:[%s239 + $0x160] sm:$0xff]
        %v447 = vld [vmem:[%s239 + $0x168] sm:$0xff]
        %v448 = vld [vmem:[%s239 + $0x170] sm:$0xff]
        %v449 = vld [vmem:[%s239 + $0x178] sm:$0xff]
        %v450 = vld [vmem:[%s239 + $0x180] sm:$0xff]
        %v451 = vld [vmem:[%s239 + $0x188] sm:$0xff]
        %v452 = vld [vmem:[%s239 + $0x190] sm:$0xff]
        %v453 = vld [vmem:[%s239 + $0x198] sm:$0xff]
        %v454 = vld [vmem:[%s239 + $0x1a0] sm:$0xff]
        %v455 = vld [vmem:[%s239 + $0x1a8] sm:$0xff]
        %v456 = vld [vmem:[%s239 + $0x1b0] sm:$0xff]
        %v457 = vld [vmem:[%s239 + $0x1b8] sm:$0xff]
        %v458 = vld [vmem:[%s239 + $0x1c0] sm:$0xff]
        %v459 = vld [vmem:[%s239 + $0x1c8] sm:$0xff]
        %v460 = vld [vmem:[%s239 + $0x1d0] sm:$0xff]
        %v461 = vld [vmem:[%s239 + $0x1d8] sm:$0xff]
        %v462 = vld [vmem:[%s239 + $0x1e0] sm:$0xff]
        %v463 = vld [vmem:[%s239 + $0x1e8] sm:$0xff]
        %v464 = vld [vmem:[%s239 + $0x1f0] sm:$0xff]
        %v465 = vld [vmem:[%s239 + $0x1f8] sm:$0xff]
        %v466 = vld [vmem:[%s231] sm:$0xff]
        %v467 = vld [vmem:[%s231 + $0x8] sm:$0xff]
        %v468 = vld [vmem:[%s231 + $0x10] sm:$0xff]
        %v469 = vld [vmem:[%s231 + $0x18] sm:$0xff]
        %v470 = vld [vmem:[%s231 + $0x20] sm:$0xff]
        %v471 = vld [vmem:[%s231 + $0x28] sm:$0xff]
        %v472 = vld [vmem:[%s231 + $0x30] sm:$0xff]
        %v473 = vld [vmem:[%s231 + $0x38] sm:$0xff]
        %v474 = vld [vmem:[%s231 + $0x40] sm:$0xff]
        %v475 = vld [vmem:[%s231 + $0x48] sm:$0xff]
        %v476 = vld [vmem:[%s231 + $0x50] sm:$0xff]
        %v477 = vld [vmem:[%s231 + $0x58] sm:$0xff]
        %v478 = vld [vmem:[%s231 + $0x60] sm:$0xff]
        %v479 = vld [vmem:[%s231 + $0x68] sm:$0xff]
        %v480 = vld [vmem:[%s231 + $0x70] sm:$0xff]
        %v481 = vld [vmem:[%s231 + $0x78] sm:$0xff]
        %v482 = vld [vmem:[%s231 + $0x80] sm:$0xff]
        %v483 = vld [vmem:[%s231 + $0x88] sm:$0xff]
        %v484 = vld [vmem:[%s231 + $0x90] sm:$0xff]
        %v485 = vld [vmem:[%s231 + $0x98] sm:$0xff]
        %v486 = vld [vmem:[%s231 + $0xa0] sm:$0xff]
        %v487 = vld [vmem:[%s231 + $0xa8] sm:$0xff]
        %v488 = vld [vmem:[%s231 + $0xb0] sm:$0xff]
        %v489 = vld [vmem:[%s231 + $0xb8] sm:$0xff]
        %v490 = vld [vmem:[%s231 + $0xc0] sm:$0xff]
        %v491 = vld [vmem:[%s231 + $0xc8] sm:$0xff]
        %v492 = vld [vmem:[%s231 + $0xd0] sm:$0xff]
        %v493 = vld [vmem:[%s231 + $0xd8] sm:$0xff]
        %v494 = vld [vmem:[%s231 + $0xe0] sm:$0xff]
        %v495 = vld [vmem:[%s231 + $0xe8] sm:$0xff]
        %v496 = vld [vmem:[%s231 + $0xf0] sm:$0xff]
        %v497 = vld [vmem:[%s231 + $0xf8] sm:$0xff]
        %v498 = vld [vmem:[%s231 + $0x100] sm:$0xff]
        %v499 = vld [vmem:[%s231 + $0x108] sm:$0xff]
        %v500 = vld [vmem:[%s231 + $0x110] sm:$0xff]
        %v501 = vld [vmem:[%s231 + $0x118] sm:$0xff]
        %v502 = vld [vmem:[%s231 + $0x120] sm:$0xff]
        %v503 = vld [vmem:[%s231 + $0x128] sm:$0xff]
        %v504 = vld [vmem:[%s231 + $0x130] sm:$0xff]
        %v505 = vld [vmem:[%s231 + $0x138] sm:$0xff]
        %v506 = vld [vmem:[%s231 + $0x140] sm:$0xff]
        %v507 = vld [vmem:[%s231 + $0x148] sm:$0xff]
        %v508 = vld [vmem:[%s231 + $0x150] sm:$0xff]
        %v509 = vld [vmem:[%s231 + $0x158] sm:$0xff]
        %v510 = vld [vmem:[%s231 + $0x160] sm:$0xff]
        %v511 = vld [vmem:[%s231 + $0x168] sm:$0xff]
        %v512 = vld [vmem:[%s231 + $0x170] sm:$0xff]
        %v513 = vld [vmem:[%s231 + $0x178] sm:$0xff]
        %v514 = vld [vmem:[%s231 + $0x180] sm:$0xff]
        %v515 = vld [vmem:[%s231 + $0x188] sm:$0xff]
        %v516 = vld [vmem:[%s231 + $0x190] sm:$0xff]
        %v517 = vld [vmem:[%s231 + $0x198] sm:$0xff]
        %v518 = vld [vmem:[%s231 + $0x1a0] sm:$0xff]
        %v519 = vld [vmem:[%s231 + $0x1a8] sm:$0xff]
        %v520 = vld [vmem:[%s231 + $0x1b0] sm:$0xff]
        %v521 = vld [vmem:[%s231 + $0x1b8] sm:$0xff]
        %v522 = vld [vmem:[%s231 + $0x1c0] sm:$0xff]
        %v523 = vld [vmem:[%s231 + $0x1c8] sm:$0xff]
        %v524 = vld [vmem:[%s231 + $0x1d0] sm:$0xff]
        %v525 = vld [vmem:[%s231 + $0x1d8] sm:$0xff]
        %v526 = vld [vmem:[%s231 + $0x1e0] sm:$0xff]
        %v527 = vld [vmem:[%s231 + $0x1e8] sm:$0xff]
        %v528 = vld [vmem:[%s231 + $0x1f0] sm:$0xff]
        %v529 = vld [vmem:[%s231 + $0x1f8] sm:$0xff]
        %v594 = vunpack.c.l.b16 %v466
        %v595 = vunpack.c.h.b16 %v466
        %v596 = vunpack.c.l.b16 %v467
        %v597 = vunpack.c.h.b16 %v467
        %v598 = vunpack.c.l.b16 %v468
        %v599 = vunpack.c.h.b16 %v468
        %v600 = vunpack.c.l.b16 %v469
        %v601 = vunpack.c.h.b16 %v469
        %v602 = vunpack.c.l.b16 %v470
        %v603 = vunpack.c.h.b16 %v470
        %v604 = vunpack.c.l.b16 %v471
        %v605 = vunpack.c.h.b16 %v471
        %v606 = vunpack.c.l.b16 %v472
        %v607 = vunpack.c.h.b16 %v472
        %v608 = vunpack.c.l.b16 %v473
        %v609 = vunpack.c.h.b16 %v473
        %v610 = vunpack.c.l.b16 %v474
        %v611 = vunpack.c.h.b16 %v474
        %v612 = vunpack.c.l.b16 %v475
        %v613 = vunpack.c.h.b16 %v475
        %v614 = vunpack.c.l.b16 %v476
        %v615 = vunpack.c.h.b16 %v476
        %v616 = vunpack.c.l.b16 %v477
        %v617 = vunpack.c.h.b16 %v477
        %v618 = vunpack.c.l.b16 %v478
        %v619 = vunpack.c.h.b16 %v478
        %v620 = vunpack.c.l.b16 %v479
        %v621 = vunpack.c.h.b16 %v479
        %v622 = vunpack.c.l.b16 %v480
        %v623 = vunpack.c.h.b16 %v480
        %v624 = vunpack.c.l.b16 %v481
        %v625 = vunpack.c.h.b16 %v481
        %v626 = vunpack.c.l.b16 %v482
        %v627 = vunpack.c.h.b16 %v482
        %v628 = vunpack.c.l.b16 %v483
        %v629 = vunpack.c.h.b16 %v483
        %v630 = vunpack.c.l.b16 %v484
        %v631 = vunpack.c.h.b16 %v484
        %v632 = vunpack.c.l.b16 %v485
        %v633 = vunpack.c.h.b16 %v485
        %v634 = vunpack.c.l.b16 %v486
        %v635 = vunpack.c.h.b16 %v486
        %v636 = vunpack.c.l.b16 %v487
        %v637 = vunpack.c.h.b16 %v487
        %v638 = vunpack.c.l.b16 %v488
        %v639 = vunpack.c.h.b16 %v488
        %v640 = vunpack.c.l.b16 %v489
        %v641 = vunpack.c.h.b16 %v489
        %v642 = vunpack.c.l.b16 %v490
        %v643 = vunpack.c.h.b16 %v490
        %v644 = vunpack.c.l.b16 %v491
        %v645 = vunpack.c.h.b16 %v491
        %v646 = vunpack.c.l.b16 %v492
        %v647 = vunpack.c.h.b16 %v492
        %v648 = vunpack.c.l.b16 %v493
        %v649 = vunpack.c.h.b16 %v493
        %v650 = vunpack.c.l.b16 %v494
        %v651 = vunpack.c.h.b16 %v494
        %v652 = vunpack.c.l.b16 %v495
        %v653 = vunpack.c.h.b16 %v495
        %v654 = vunpack.c.l.b16 %v496
        %v655 = vunpack.c.h.b16 %v496
        %v656 = vunpack.c.l.b16 %v497
        %v657 = vunpack.c.h.b16 %v497
        %v658 = vunpack.c.l.b16 %v498
        %v659 = vunpack.c.h.b16 %v498
        %v660 = vunpack.c.l.b16 %v499
        %v661 = vunpack.c.h.b16 %v499
        %v662 = vunpack.c.l.b16 %v500
        %v663 = vunpack.c.h.b16 %v500
        %v664 = vunpack.c.l.b16 %v501
        %v665 = vunpack.c.h.b16 %v501
        %v666 = vunpack.c.l.b16 %v502
        %v667 = vunpack.c.h.b16 %v502
        %v668 = vunpack.c.l.b16 %v503
        %v669 = vunpack.c.h.b16 %v503
        %v670 = vunpack.c.l.b16 %v504
        %v671 = vunpack.c.h.b16 %v504
        %v672 = vunpack.c.l.b16 %v505
        %v673 = vunpack.c.h.b16 %v505
        %v674 = vunpack.c.l.b16 %v506
        %v675 = vunpack.c.h.b16 %v506
        %v676 = vunpack.c.l.b16 %v507
        %v677 = vunpack.c.h.b16 %v507
        %v678 = vunpack.c.l.b16 %v508
        %v679 = vunpack.c.h.b16 %v508
        %v680 = vunpack.c.l.b16 %v509
        %v681 = vunpack.c.h.b16 %v509
        %v682 = vunpack.c.l.b16 %v510
        %v683 = vunpack.c.h.b16 %v510
        %v684 = vunpack.c.l.b16 %v511
        %v685 = vunpack.c.h.b16 %v511
        %v686 = vunpack.c.l.b16 %v512
        %v687 = vunpack.c.h.b16 %v512
        %v688 = vunpack.c.l.b16 %v513
        %v689 = vunpack.c.h.b16 %v513
        %v690 = vunpack.c.l.b16 %v514
        %v691 = vunpack.c.h.b16 %v514
        %v692 = vunpack.c.l.b16 %v515
        %v693 = vunpack.c.h.b16 %v515
        %v694 = vunpack.c.l.b16 %v516
        %v695 = vunpack.c.h.b16 %v516
        %v696 = vunpack.c.l.b16 %v517
        %v697 = vunpack.c.h.b16 %v517
        %v698 = vunpack.c.l.b16 %v518
        %v699 = vunpack.c.h.b16 %v518
        %v700 = vunpack.c.l.b16 %v519
        %v701 = vunpack.c.h.b16 %v519
        %v702 = vunpack.c.l.b16 %v520
        %v703 = vunpack.c.h.b16 %v520
        %v704 = vunpack.c.l.b16 %v521
        %v705 = vunpack.c.h.b16 %v521
        %v706 = vunpack.c.l.b16 %v522
        %v707 = vunpack.c.h.b16 %v522
        %v708 = vunpack.c.l.b16 %v523
        %v709 = vunpack.c.h.b16 %v523
        %v710 = vunpack.c.l.b16 %v524
        %v711 = vunpack.c.h.b16 %v524
        %v712 = vunpack.c.l.b16 %v525
        %v713 = vunpack.c.h.b16 %v525
        %v714 = vunpack.c.l.b16 %v526
        %v715 = vunpack.c.h.b16 %v526
        %v716 = vunpack.c.l.b16 %v527
        %v717 = vunpack.c.h.b16 %v527
        %v718 = vunpack.c.l.b16 %v528
        %v719 = vunpack.c.h.b16 %v528
        %v720 = vunpack.c.l.b16 %v529
        %v721 = vunpack.c.h.b16 %v529
        %v722 = vpack.c.b16 %v598, %v594
        %v723 = vpack.c.b16 %v599, %v595
        %v724 = vpack.c.b16 %v600, %v596
        %v725 = vpack.c.b16 %v601, %v597
        %v726 = vpack.c.b16 %v606, %v602
        %v727 = vpack.c.b16 %v607, %v603
        %v728 = vpack.c.b16 %v608, %v604
        %v729 = vpack.c.b16 %v609, %v605
        %v730 = vpack.c.b16 %v614, %v610
        %v731 = vpack.c.b16 %v615, %v611
        %v732 = vpack.c.b16 %v616, %v612
        %v733 = vpack.c.b16 %v617, %v613
        %v734 = vpack.c.b16 %v622, %v618
        %v735 = vpack.c.b16 %v623, %v619
        %v736 = vpack.c.b16 %v624, %v620
        %v737 = vpack.c.b16 %v625, %v621
        %v738 = vpack.c.b16 %v630, %v626
        %v739 = vpack.c.b16 %v631, %v627
        %v740 = vpack.c.b16 %v632, %v628
        %v741 = vpack.c.b16 %v633, %v629
        %v742 = vpack.c.b16 %v638, %v634
        %v743 = vpack.c.b16 %v639, %v635
        %v744 = vpack.c.b16 %v640, %v636
        %v745 = vpack.c.b16 %v641, %v637
        %v746 = vpack.c.b16 %v646, %v642
        %v747 = vpack.c.b16 %v647, %v643
        %v748 = vpack.c.b16 %v648, %v644
        %v749 = vpack.c.b16 %v649, %v645
        %v750 = vpack.c.b16 %v654, %v650
        %v751 = vpack.c.b16 %v655, %v651
        %v752 = vpack.c.b16 %v656, %v652
        %v753 = vpack.c.b16 %v657, %v653
        %v754 = vpack.c.b16 %v662, %v658
        %v755 = vpack.c.b16 %v663, %v659
        %v756 = vpack.c.b16 %v664, %v660
        %v757 = vpack.c.b16 %v665, %v661
        %v758 = vpack.c.b16 %v670, %v666
        %v759 = vpack.c.b16 %v671, %v667
        %v760 = vpack.c.b16 %v672, %v668
        %v761 = vpack.c.b16 %v673, %v669
        %v762 = vpack.c.b16 %v678, %v674
        %v763 = vpack.c.b16 %v679, %v675
        %v764 = vpack.c.b16 %v680, %v676
        %v765 = vpack.c.b16 %v681, %v677
        %v766 = vpack.c.b16 %v686, %v682
        %v767 = vpack.c.b16 %v687, %v683
        %v768 = vpack.c.b16 %v688, %v684
        %v769 = vpack.c.b16 %v689, %v685
        %v770 = vpack.c.b16 %v694, %v690
        %v771 = vpack.c.b16 %v695, %v691
        %v772 = vpack.c.b16 %v696, %v692
        %v773 = vpack.c.b16 %v697, %v693
        %v774 = vpack.c.b16 %v702, %v698
        %v775 = vpack.c.b16 %v703, %v699
        %v776 = vpack.c.b16 %v704, %v700
        %v777 = vpack.c.b16 %v705, %v701
        %v778 = vpack.c.b16 %v710, %v706
        %v779 = vpack.c.b16 %v711, %v707
        %v780 = vpack.c.b16 %v712, %v708
        %v781 = vpack.c.b16 %v713, %v709
        %v782 = vpack.c.b16 %v718, %v714
        %v783 = vpack.c.b16 %v719, %v715
        %v784 = vpack.c.b16 %v720, %v716
        %v785 = vpack.c.b16 %v721, %v717
        %850 = vmatpush.bf16.msra.mxu0 %v750
        %851 = vmatpush.bf16.msra.mxu0 %v746
        %852 = vmatpush.bf16.msra.mxu0 %v742
        %853 = vmatpush.bf16.msra.mxu0 %v738
        %854 = vmatpush.bf16.msra.mxu0 %v734
        %855 = vmatpush.bf16.msra.mxu0 %v730
        %856 = vmatpush.bf16.msra.mxu0 %v726
        %857 = vmatpush.bf16.msra.mxu0 %v722
        %858 = vmatmul.bf16.gmra.mxu0 %v386
        %v859 = vpop.f32.mrf.mxu0
        %v860 = vadd.f32 0.0, %v859
        %v861 = vpop.f32.mrf.mxu0
        %v862 = vadd.f32 0.0, %v861
        %863 = vmatmul.bf16.gmra.mxu0 %v388
        %v864 = vpop.f32.mrf.mxu0
        %v865 = vadd.f32 0.0, %v864
        %v866 = vpop.f32.mrf.mxu0
        %v867 = vadd.f32 0.0, %v866
        %868 = vmatmul.bf16.gmra.mxu0 %v390
        %v869 = vpop.f32.mrf.mxu0
        %v870 = vadd.f32 0.0, %v869
        %v871 = vpop.f32.mrf.mxu0
        %v872 = vadd.f32 0.0, %v871
        %873 = vmatmul.bf16.gmra.mxu0 %v392
        %v874 = vpop.f32.mrf.mxu0
        %v875 = vadd.f32 0.0, %v874
        %v876 = vpop.f32.mrf.mxu0
        %v877 = vadd.f32 0.0, %v876
        %878 = vmatmul.bf16.gmra.mxu0 %v394
        %v879 = vpop.f32.mrf.mxu0
        %v880 = vadd.f32 0.0, %v879
        %v881 = vpop.f32.mrf.mxu0
        %v882 = vadd.f32 0.0, %v881
        %883 = vmatmul.bf16.gmra.mxu0 %v396
        %v884 = vpop.f32.mrf.mxu0
        %v885 = vadd.f32 0.0, %v884
        %v886 = vpop.f32.mrf.mxu0
        %v887 = vadd.f32 0.0, %v886
        %888 = vmatmul.bf16.gmra.mxu0 %v398
        %v889 = vpop.f32.mrf.mxu0
        %v890 = vadd.f32 0.0, %v889
        %v891 = vpop.f32.mrf.mxu0
        %v892 = vadd.f32 0.0, %v891
        %893 = vmatmul.bf16.gmra.mxu0 %v400
        %v894 = vpop.f32.mrf.mxu0
        %v895 = vadd.f32 0.0, %v894
        %v896 = vpop.f32.mrf.mxu0
        %v897 = vadd.f32 0.0, %v896
        %898 = vdwg.mxu0
        %899 = vmatpush.bf16.msra.mxu0 %v782
        %900 = vmatpush.bf16.msra.mxu0 %v778
        %901 = vmatpush.bf16.msra.mxu0 %v774
        %902 = vmatpush.bf16.msra.mxu0 %v770
        %903 = vmatpush.bf16.msra.mxu0 %v766
        %904 = vmatpush.bf16.msra.mxu0 %v762
        %905 = vmatpush.bf16.msra.mxu0 %v758
        %906 = vmatpush.bf16.msra.mxu0 %v754
        %907 = vmatmul.bf16.gmra.mxu0 %v387
        %v908 = vpop.f32.mrf.mxu0
        %v909 = vadd.f32 %v860, %v908
        %v910 = vpop.f32.mrf.mxu0
        %v911 = vadd.f32 %v862, %v910
        %912 = vmatmul.bf16.gmra.mxu0 %v389
        %v913 = vpop.f32.mrf.mxu0
        %v914 = vadd.f32 %v865, %v913
        %v915 = vpop.f32.mrf.mxu0
        %v916 = vadd.f32 %v867, %v915
        %917 = vmatmul.bf16.gmra.mxu0 %v391
        %v918 = vpop.f32.mrf.mxu0
        %v919 = vadd.f32 %v870, %v918
        %v920 = vpop.f32.mrf.mxu0
        %v921 = vadd.f32 %v872, %v920
        %922 = vmatmul.bf16.gmra.mxu0 %v393
        %v923 = vpop.f32.mrf.mxu0
        %v924 = vadd.f32 %v875, %v923
        %v925 = vpop.f32.mrf.mxu0
        %v926 = vadd.f32 %v877, %v925
        %927 = vmatmul.bf16.gmra.mxu0 %v395
        %v928 = vpop.f32.mrf.mxu0
        %v929 = vadd.f32 %v880, %v928
        %v930 = vpop.f32.mrf.mxu0
        %v931 = vadd.f32 %v882, %v930
        %932 = vmatmul.bf16.gmra.mxu0 %v397
        %v933 = vpop.f32.mrf.mxu0
        %v934 = vadd.f32 %v885, %v933
        %v935 = vpop.f32.mrf.mxu0
        %v936 = vadd.f32 %v887, %v935
        %937 = vmatmul.bf16.gmra.mxu0 %v399
        %v938 = vpop.f32.mrf.mxu0
        %v939 = vadd.f32 %v890, %v938
        %v940 = vpop.f32.mrf.mxu0
        %v941 = vadd.f32 %v892, %v940
        %942 = vmatmul.bf16.gmra.mxu0 %v401
        %v943 = vpop.f32.mrf.mxu0
        %v944 = vadd.f32 %v895, %v943
        %v945 = vpop.f32.mrf.mxu0
        %v946 = vadd.f32 %v897, %v945
        %947 = vdwg.mxu0
        %948 = vmatpush.bf16.msra.mxu0 %v751
        %949 = vmatpush.bf16.msra.mxu0 %v747
        %950 = vmatpush.bf16.msra.mxu0 %v743
        %951 = vmatpush.bf16.msra.mxu0 %v739
        %952 = vmatpush.bf16.msra.mxu0 %v735
        %953 = vmatpush.bf16.msra.mxu0 %v731
        %954 = vmatpush.bf16.msra.mxu0 %v727
        %955 = vmatpush.bf16.msra.mxu0 %v723
        %956 = vmatmul.bf16.gmra.mxu0 %v386
        %v957 = vpop.f32.mrf.mxu0
        %v958 = vadd.f32 0.0, %v957
        %v959 = vpop.f32.mrf.mxu0
        %v960 = vadd.f32 0.0, %v959
        %961 = vmatmul.bf16.gmra.mxu0 %v388
        %v962 = vpop.f32.mrf.mxu0
        %v963 = vadd.f32 0.0, %v962
        %v964 = vpop.f32.mrf.mxu0
        %v965 = vadd.f32 0.0, %v964
        %966 = vmatmul.bf16.gmra.mxu0 %v390
        %v967 = vpop.f32.mrf.mxu0
        %v968 = vadd.f32 0.0, %v967
        %v969 = vpop.f32.mrf.mxu0
        %v970 = vadd.f32 0.0, %v969
        %971 = vmatmul.bf16.gmra.mxu0 %v392
        %v972 = vpop.f32.mrf.mxu0
        %v973 = vadd.f32 0.0, %v972
        %v974 = vpop.f32.mrf.mxu0
        %v975 = vadd.f32 0.0, %v974
        %976 = vmatmul.bf16.gmra.mxu0 %v394
        %v977 = vpop.f32.mrf.mxu0
        %v978 = vadd.f32 0.0, %v977
        %v979 = vpop.f32.mrf.mxu0
        %v980 = vadd.f32 0.0, %v979
        %981 = vmatmul.bf16.gmra.mxu0 %v396
        %v982 = vpop.f32.mrf.mxu0
        %v983 = vadd.f32 0.0, %v982
        %v984 = vpop.f32.mrf.mxu0
        %v985 = vadd.f32 0.0, %v984
        %986 = vmatmul.bf16.gmra.mxu0 %v398
        %v987 = vpop.f32.mrf.mxu0
        %v988 = vadd.f32 0.0, %v987
        %v989 = vpop.f32.mrf.mxu0
        %v990 = vadd.f32 0.0, %v989
        %991 = vmatmul.bf16.gmra.mxu0 %v400
        %v992 = vpop.f32.mrf.mxu0
        %v993 = vadd.f32 0.0, %v992
        %v994 = vpop.f32.mrf.mxu0
        %v995 = vadd.f32 0.0, %v994
        %996 = vdwg.mxu0
        %997 = vmatpush.bf16.msra.mxu0 %v783
        %998 = vmatpush.bf16.msra.mxu0 %v779
        %999 = vmatpush.bf16.msra.mxu0 %v775
        %1000 = vmatpush.bf16.msra.mxu0 %v771
        %1001 = vmatpush.bf16.msra.mxu0 %v767
        %1002 = vmatpush.bf16.msra.mxu0 %v763
        %1003 = vmatpush.bf16.msra.mxu0 %v759
        %1004 = vmatpush.bf16.msra.mxu0 %v755
        %1005 = vmatmul.bf16.gmra.mxu0 %v387
        %v1006 = vpop.f32.mrf.mxu0
        %v1007 = vadd.f32 %v958, %v1006
        %v1008 = vpop.f32.mrf.mxu0
        %v1009 = vadd.f32 %v960, %v1008
        %1010 = vmatmul.bf16.gmra.mxu0 %v389
        %v1011 = vpop.f32.mrf.mxu0
        %v1012 = vadd.f32 %v963, %v1011
        %v1013 = vpop.f32.mrf.mxu0
        %v1014 = vadd.f32 %v965, %v1013
        %1015 = vmatmul.bf16.gmra.mxu0 %v391
        %v1016 = vpop.f32.mrf.mxu0
        %v1017 = vadd.f32 %v968, %v1016
        %v1018 = vpop.f32.mrf.mxu0
        %v1019 = vadd.f32 %v970, %v1018
        %1020 = vmatmul.bf16.gmra.mxu0 %v393
        %v1021 = vpop.f32.mrf.mxu0
        %v1022 = vadd.f32 %v973, %v1021
        %v1023 = vpop.f32.mrf.mxu0
        %v1024 = vadd.f32 %v975, %v1023
        %1025 = vmatmul.bf16.gmra.mxu0 %v395
        %v1026 = vpop.f32.mrf.mxu0
        %v1027 = vadd.f32 %v978, %v1026
        %v1028 = vpop.f32.mrf.mxu0
        %v1029 = vadd.f32 %v980, %v1028
        %1030 = vmatmul.bf16.gmra.mxu0 %v397
        %v1031 = vpop.f32.mrf.mxu0
        %v1032 = vadd.f32 %v983, %v1031
        %v1033 = vpop.f32.mrf.mxu0
        %v1034 = vadd.f32 %v985, %v1033
        %1035 = vmatmul.bf16.gmra.mxu0 %v399
        %v1036 = vpop.f32.mrf.mxu0
        %v1037 = vadd.f32 %v988, %v1036
        %v1038 = vpop.f32.mrf.mxu0
        %v1039 = vadd.f32 %v990, %v1038
        %1040 = vmatmul.bf16.gmra.mxu0 %v401
        %v1041 = vpop.f32.mrf.mxu0
        %v1042 = vadd.f32 %v993, %v1041
        %v1043 = vpop.f32.mrf.mxu0
        %v1044 = vadd.f32 %v995, %v1043
        %1045 = vdwg.mxu0
        %1046 = vmatpush.bf16.msra.mxu0 %v752
        %1047 = vmatpush.bf16.msra.mxu0 %v748
        %1048 = vmatpush.bf16.msra.mxu0 %v744
        %1049 = vmatpush.bf16.msra.mxu0 %v740
        %1050 = vmatpush.bf16.msra.mxu0 %v736
        %1051 = vmatpush.bf16.msra.mxu0 %v732
        %1052 = vmatpush.bf16.msra.mxu0 %v728
        %1053 = vmatpush.bf16.msra.mxu0 %v724
        %1054 = vmatmul.bf16.gmra.mxu0 %v386
        %v1055 = vpop.f32.mrf.mxu0
        %v1056 = vadd.f32 0.0, %v1055
        %v1057 = vpop.f32.mrf.mxu0
        %v1058 = vadd.f32 0.0, %v1057
        %1059 = vmatmul.bf16.gmra.mxu0 %v388
        %v1060 = vpop.f32.mrf.mxu0
        %v1061 = vadd.f32 0.0, %v1060
        %v1062 = vpop.f32.mrf.mxu0
        %v1063 = vadd.f32 0.0, %v1062
        %1064 = vmatmul.bf16.gmra.mxu0 %v390
        %v1065 = vpop.f32.mrf.mxu0
        %v1066 = vadd.f32 0.0, %v1065
        %v1067 = vpop.f32.mrf.mxu0
        %v1068 = vadd.f32 0.0, %v1067
        %1069 = vmatmul.bf16.gmra.mxu0 %v392
        %v1070 = vpop.f32.mrf.mxu0
        %v1071 = vadd.f32 0.0, %v1070
        %v1072 = vpop.f32.mrf.mxu0
        %v1073 = vadd.f32 0.0, %v1072
        %1074 = vmatmul.bf16.gmra.mxu0 %v394
        %v1075 = vpop.f32.mrf.mxu0
        %v1076 = vadd.f32 0.0, %v1075
        %v1077 = vpop.f32.mrf.mxu0
        %v1078 = vadd.f32 0.0, %v1077
        %1079 = vmatmul.bf16.gmra.mxu0 %v396
        %v1080 = vpop.f32.mrf.mxu0
        %v1081 = vadd.f32 0.0, %v1080
        %v1082 = vpop.f32.mrf.mxu0
        %v1083 = vadd.f32 0.0, %v1082
        %1084 = vmatmul.bf16.gmra.mxu0 %v398
        %v1085 = vpop.f32.mrf.mxu0
        %v1086 = vadd.f32 0.0, %v1085
        %v1087 = vpop.f32.mrf.mxu0
        %v1088 = vadd.f32 0.0, %v1087
        %1089 = vmatmul.bf16.gmra.mxu0 %v400
        %v1090 = vpop.f32.mrf.mxu0
        %v1091 = vadd.f32 0.0, %v1090
        %v1092 = vpop.f32.mrf.mxu0
        %v1093 = vadd.f32 0.0, %v1092
        %1094 = vdwg.mxu0
        %1095 = vmatpush.bf16.msra.mxu0 %v784
        %1096 = vmatpush.bf16.msra.mxu0 %v780
        %1097 = vmatpush.bf16.msra.mxu0 %v776
        %1098 = vmatpush.bf16.msra.mxu0 %v772
        %1099 = vmatpush.bf16.msra.mxu0 %v768
        %1100 = vmatpush.bf16.msra.mxu0 %v764
        %1101 = vmatpush.bf16.msra.mxu0 %v760
        %1102 = vmatpush.bf16.msra.mxu0 %v756
        %1103 = vmatmul.bf16.gmra.mxu0 %v387
        %v1104 = vpop.f32.mrf.mxu0
        %v1105 = vadd.f32 %v1056, %v1104
        %v1106 = vpop.f32.mrf.mxu0
        %v1107 = vadd.f32 %v1058, %v1106
        %1108 = vmatmul.bf16.gmra.mxu0 %v389
        %v1109 = vpop.f32.mrf.mxu0
        %v1110 = vadd.f32 %v1061, %v1109
        %v1111 = vpop.f32.mrf.mxu0
        %v1112 = vadd.f32 %v1063, %v1111
        %1113 = vmatmul.bf16.gmra.mxu0 %v391
        %v1114 = vpop.f32.mrf.mxu0
        %v1115 = vadd.f32 %v1066, %v1114
        %v1116 = vpop.f32.mrf.mxu0
        %v1117 = vadd.f32 %v1068, %v1116
        %1118 = vmatmul.bf16.gmra.mxu0 %v393
        %v1119 = vpop.f32.mrf.mxu0
        %v1120 = vadd.f32 %v1071, %v1119
        %v1121 = vpop.f32.mrf.mxu0
        %v1122 = vadd.f32 %v1073, %v1121
        %1123 = vmatmul.bf16.gmra.mxu0 %v395
        %v1124 = vpop.f32.mrf.mxu0
        %v1125 = vadd.f32 %v1076, %v1124
        %v1126 = vpop.f32.mrf.mxu0
        %v1127 = vadd.f32 %v1078, %v1126
        %1128 = vmatmul.bf16.gmra.mxu0 %v397
        %v1129 = vpop.f32.mrf.mxu0
        %v1130 = vadd.f32 %v1081, %v1129
        %v1131 = vpop.f32.mrf.mxu0
        %v1132 = vadd.f32 %v1083, %v1131
        %1133 = vmatmul.bf16.gmra.mxu0 %v399
        %v1134 = vpop.f32.mrf.mxu0
        %v1135 = vadd.f32 %v1086, %v1134
        %v1136 = vpop.f32.mrf.mxu0
        %v1137 = vadd.f32 %v1088, %v1136
        %1138 = vmatmul.bf16.gmra.mxu0 %v401
        %v1139 = vpop.f32.mrf.mxu0
        %v1140 = vadd.f32 %v1091, %v1139
        %v1141 = vpop.f32.mrf.mxu0
        %v1142 = vadd.f32 %v1093, %v1141
        %1143 = vdwg.mxu0
        %1144 = vmatpush.bf16.msra.mxu0 %v753
        %1145 = vmatpush.bf16.msra.mxu0 %v749
        %1146 = vmatpush.bf16.msra.mxu0 %v745
        %1147 = vmatpush.bf16.msra.mxu0 %v741
        %1148 = vmatpush.bf16.msra.mxu0 %v737
        %1149 = vmatpush.bf16.msra.mxu0 %v733
        %1150 = vmatpush.bf16.msra.mxu0 %v729
        %1151 = vmatpush.bf16.msra.mxu0 %v725
        %1152 = vmatmul.bf16.gmra.mxu0 %v386
        %v1153 = vpop.f32.mrf.mxu0
        %v1154 = vadd.f32 0.0, %v1153
        %v1155 = vpop.f32.mrf.mxu0
        %v1156 = vadd.f32 0.0, %v1155
        %1157 = vmatmul.bf16.gmra.mxu0 %v388
        %v1158 = vpop.f32.mrf.mxu0
        %v1159 = vadd.f32 0.0, %v1158
        %v1160 = vpop.f32.mrf.mxu0
        %v1161 = vadd.f32 0.0, %v1160
        %1162 = vmatmul.bf16.gmra.mxu0 %v390
        %v1163 = vpop.f32.mrf.mxu0
        %v1164 = vadd.f32 0.0, %v1163
        %v1165 = vpop.f32.mrf.mxu0
        %v1166 = vadd.f32 0.0, %v1165
        %1167 = vmatmul.bf16.gmra.mxu0 %v392
        %v1168 = vpop.f32.mrf.mxu0
        %v1169 = vadd.f32 0.0, %v1168
        %v1170 = vpop.f32.mrf.mxu0
        %v1171 = vadd.f32 0.0, %v1170
        %1172 = vmatmul.bf16.gmra.mxu0 %v394
        %v1173 = vpop.f32.mrf.mxu0
        %v1174 = vadd.f32 0.0, %v1173
        %v1175 = vpop.f32.mrf.mxu0
        %v1176 = vadd.f32 0.0, %v1175
        %1177 = vmatmul.bf16.gmra.mxu0 %v396
        %v1178 = vpop.f32.mrf.mxu0
        %v1179 = vadd.f32 0.0, %v1178
        %v1180 = vpop.f32.mrf.mxu0
        %v1181 = vadd.f32 0.0, %v1180
        %1182 = vmatmul.bf16.gmra.mxu0 %v398
        %v1183 = vpop.f32.mrf.mxu0
        %v1184 = vadd.f32 0.0, %v1183
        %v1185 = vpop.f32.mrf.mxu0
        %v1186 = vadd.f32 0.0, %v1185
        %1187 = vmatmul.bf16.gmra.mxu0 %v400
        %v1188 = vpop.f32.mrf.mxu0
        %v1189 = vadd.f32 0.0, %v1188
        %v1190 = vpop.f32.mrf.mxu0
        %v1191 = vadd.f32 0.0, %v1190
        %1192 = vdwg.mxu0
        %1193 = vmatpush.bf16.msra.mxu0 %v785
        %1194 = vmatpush.bf16.msra.mxu0 %v781
        %1195 = vmatpush.bf16.msra.mxu0 %v777
        %1196 = vmatpush.bf16.msra.mxu0 %v773
        %1197 = vmatpush.bf16.msra.mxu0 %v769
        %1198 = vmatpush.bf16.msra.mxu0 %v765
        %1199 = vmatpush.bf16.msra.mxu0 %v761
        %1200 = vmatpush.bf16.msra.mxu0 %v757
        %1201 = vmatmul.bf16.gmra.mxu0 %v387
        %v1202 = vpop.f32.mrf.mxu0
        %v1203 = vadd.f32 %v1154, %v1202
        %v1204 = vpop.f32.mrf.mxu0
        %v1205 = vadd.f32 %v1156, %v1204
        %1206 = vmatmul.bf16.gmra.mxu0 %v389
        %v1207 = vpop.f32.mrf.mxu0
        %v1208 = vadd.f32 %v1159, %v1207
        %v1209 = vpop.f32.mrf.mxu0
        %v1210 = vadd.f32 %v1161, %v1209
        %1211 = vmatmul.bf16.gmra.mxu0 %v391
        %v1212 = vpop.f32.mrf.mxu0
        %v1213 = vadd.f32 %v1164, %v1212
        %v1214 = vpop.f32.mrf.mxu0
        %v1215 = vadd.f32 %v1166, %v1214
        %1216 = vmatmul.bf16.gmra.mxu0 %v393
        %v1217 = vpop.f32.mrf.mxu0
        %v1218 = vadd.f32 %v1169, %v1217
        %v1219 = vpop.f32.mrf.mxu0
        %v1220 = vadd.f32 %v1171, %v1219
        %1221 = vmatmul.bf16.gmra.mxu0 %v395
        %v1222 = vpop.f32.mrf.mxu0
        %v1223 = vadd.f32 %v1174, %v1222
        %v1224 = vpop.f32.mrf.mxu0
        %v1225 = vadd.f32 %v1176, %v1224
        %1226 = vmatmul.bf16.gmra.mxu0 %v397
        %v1227 = vpop.f32.mrf.mxu0
        %v1228 = vadd.f32 %v1179, %v1227
        %v1229 = vpop.f32.mrf.mxu0
        %v1230 = vadd.f32 %v1181, %v1229
        %1231 = vmatmul.bf16.gmra.mxu0 %v399
        %v1232 = vpop.f32.mrf.mxu0
        %v1233 = vadd.f32 %v1184, %v1232
        %v1234 = vpop.f32.mrf.mxu0
        %v1235 = vadd.f32 %v1186, %v1234
        %1236 = vmatmul.bf16.gmra.mxu0 %v401
        %v1237 = vpop.f32.mrf.mxu0
        %v1238 = vadd.f32 %v1189, %v1237
        %v1239 = vpop.f32.mrf.mxu0
        %v1240 = vadd.f32 %v1191, %v1239
        %1241 = vdwg.mxu0
        %v1242 = vadd.f32 %v402, %v909
        %v1243 = vadd.f32 %v403, %v1007
        %v1244 = vadd.f32 %v404, %v1105
        %v1245 = vadd.f32 %v405, %v1203
        %v1246 = vadd.f32 %v406, %v911
        %v1247 = vadd.f32 %v407, %v1009
        %v1248 = vadd.f32 %v408, %v1107
        %v1249 = vadd.f32 %v409, %v1205
        %v1250 = vadd.f32 %v410, %v914
        %v1251 = vadd.f32 %v411, %v1012
        %v1252 = vadd.f32 %v412, %v1110
        %v1253 = vadd.f32 %v413, %v1208
        %v1254 = vadd.f32 %v414, %v916
        %v1255 = vadd.f32 %v415, %v1014
        %v1256 = vadd.f32 %v416, %v1112
        %v1257 = vadd.f32 %v417, %v1210
        %v1258 = vadd.f32 %v418, %v919
        %v1259 = vadd.f32 %v419, %v1017
        %v1260 = vadd.f32 %v420, %v1115
        %v1261 = vadd.f32 %v421, %v1213
        %v1262 = vadd.f32 %v422, %v921
        %v1263 = vadd.f32 %v423, %v1019
        %v1264 = vadd.f32 %v424, %v1117
        %v1265 = vadd.f32 %v425, %v1215
        %v1266 = vadd.f32 %v426, %v924
        %v1267 = vadd.f32 %v427, %v1022
        %v1268 = vadd.f32 %v428, %v1120
        %v1269 = vadd.f32 %v429, %v1218
        %v1270 = vadd.f32 %v430, %v926
        %v1271 = vadd.f32 %v431, %v1024
        %v1272 = vadd.f32 %v432, %v1122
        %v1273 = vadd.f32 %v433, %v1220
        %v1274 = vadd.f32 %v434, %v929
        %v1275 = vadd.f32 %v435, %v1027
        %v1276 = vadd.f32 %v436, %v1125
        %v1277 = vadd.f32 %v437, %v1223
        %v1278 = vadd.f32 %v438, %v931
        %v1279 = vadd.f32 %v439, %v1029
        %v1280 = vadd.f32 %v440, %v1127
        %v1281 = vadd.f32 %v441, %v1225
        %v1282 = vadd.f32 %v442, %v934
        %v1283 = vadd.f32 %v443, %v1032
        %v1284 = vadd.f32 %v444, %v1130
        %v1285 = vadd.f32 %v445, %v1228
        %v1286 = vadd.f32 %v446, %v936
        %v1287 = vadd.f32 %v447, %v1034
        %v1288 = vadd.f32 %v448, %v1132
        %v1289 = vadd.f32 %v449, %v1230
        %v1290 = vadd.f32 %v450, %v939
        %v1291 = vadd.f32 %v451, %v1037
        %v1292 = vadd.f32 %v452, %v1135
        %v1293 = vadd.f32 %v453, %v1233
        %v1294 = vadd.f32 %v454, %v941
        %v1295 = vadd.f32 %v455, %v1039
        %v1296 = vadd.f32 %v456, %v1137
        %v1297 = vadd.f32 %v457, %v1235
        %v1298 = vadd.f32 %v458, %v944
        %v1299 = vadd.f32 %v459, %v1042
        %v1300 = vadd.f32 %v460, %v1140
        %v1301 = vadd.f32 %v461, %v1238
        %v1302 = vadd.f32 %v462, %v946
        %v1303 = vadd.f32 %v463, %v1044
        %v1304 = vadd.f32 %v464, %v1142
        %v1305 = vadd.f32 %v465, %v1240
        %1306 = vst [vmem:[%s239] sm:$0xff] %v1242
        %1307 = vst [vmem:[%s239 + $0x8] sm:$0xff] %v1243
        %1308 = vst [vmem:[%s239 + $0x10] sm:$0xff] %v1244
        %1309 = vst [vmem:[%s239 + $0x18] sm:$0xff] %v1245
        %1310 = vst [vmem:[%s239 + $0x20] sm:$0xff] %v1246
        %1311 = vst [vmem:[%s239 + $0x28] sm:$0xff] %v1247
        %1312 = vst [vmem:[%s239 + $0x30] sm:$0xff] %v1248
        %1313 = vst [vmem:[%s239 + $0x38] sm:$0xff] %v1249
        %1314 = vst [vmem:[%s239 + $0x40] sm:$0xff] %v1250
        %1315 = vst [vmem:[%s239 + $0x48] sm:$0xff] %v1251
        %1316 = vst [vmem:[%s239 + $0x50] sm:$0xff] %v1252
        %1317 = vst [vmem:[%s239 + $0x58] sm:$0xff] %v1253
        %1318 = vst [vmem:[%s239 + $0x60] sm:$0xff] %v1254
        %1319 = vst [vmem:[%s239 + $0x68] sm:$0xff] %v1255
        %1320 = vst [vmem:[%s239 + $0x70] sm:$0xff] %v1256
        %1321 = vst [vmem:[%s239 + $0x78] sm:$0xff] %v1257
        %1322 = vst [vmem:[%s239 + $0x80] sm:$0xff] %v1258
        %1323 = vst [vmem:[%s239 + $0x88] sm:$0xff] %v1259
        %1324 = vst [vmem:[%s239 + $0x90] sm:$0xff] %v1260
        %1325 = vst [vmem:[%s239 + $0x98] sm:$0xff] %v1261
        %1326 = vst [vmem:[%s239 + $0xa0] sm:$0xff] %v1262
        %1327 = vst [vmem:[%s239 + $0xa8] sm:$0xff] %v1263
        %1328 = vst [vmem:[%s239 + $0xb0] sm:$0xff] %v1264
        %1329 = vst [vmem:[%s239 + $0xb8] sm:$0xff] %v1265
        %1330 = vst [vmem:[%s239 + $0xc0] sm:$0xff] %v1266
        %1331 = vst [vmem:[%s239 + $0xc8] sm:$0xff] %v1267
        %1332 = vst [vmem:[%s239 + $0xd0] sm:$0xff] %v1268
        %1333 = vst [vmem:[%s239 + $0xd8] sm:$0xff] %v1269
        %1334 = vst [vmem:[%s239 + $0xe0] sm:$0xff] %v1270
        %1335 = vst [vmem:[%s239 + $0xe8] sm:$0xff] %v1271
        %1336 = vst [vmem:[%s239 + $0xf0] sm:$0xff] %v1272
        %1337 = vst [vmem:[%s239 + $0xf8] sm:$0xff] %v1273
        %1338 = vst [vmem:[%s239 + $0x100] sm:$0xff] %v1274
        %1339 = vst [vmem:[%s239 + $0x108] sm:$0xff] %v1275
        %1340 = vst [vmem:[%s239 + $0x110] sm:$0xff] %v1276
        %1341 = vst [vmem:[%s239 + $0x118] sm:$0xff] %v1277
        %1342 = vst [vmem:[%s239 + $0x120] sm:$0xff] %v1278
        %1343 = vst [vmem:[%s239 + $0x128] sm:$0xff] %v1279
        %1344 = vst [vmem:[%s239 + $0x130] sm:$0xff] %v1280
        %1345 = vst [vmem:[%s239 + $0x138] sm:$0xff] %v1281
        %1346 = vst [vmem:[%s239 + $0x140] sm:$0xff] %v1282
        %1347 = vst [vmem:[%s239 + $0x148] sm:$0xff] %v1283
        %1348 = vst [vmem:[%s239 + $0x150] sm:$0xff] %v1284
        %1349 = vst [vmem:[%s239 + $0x158] sm:$0xff] %v1285
        %1350 = vst [vmem:[%s239 + $0x160] sm:$0xff] %v1286
        %1351 = vst [vmem:[%s239 + $0x168] sm:$0xff] %v1287
        %1352 = vst [vmem:[%s239 + $0x170] sm:$0xff] %v1288
        %1353 = vst [vmem:[%s239 + $0x178] sm:$0xff] %v1289
        %1354 = vst [vmem:[%s239 + $0x180] sm:$0xff] %v1290
        %1355 = vst [vmem:[%s239 + $0x188] sm:$0xff] %v1291
        %1356 = vst [vmem:[%s239 + $0x190] sm:$0xff] %v1292
        %1357 = vst [vmem:[%s239 + $0x198] sm:$0xff] %v1293
        %1358 = vst [vmem:[%s239 + $0x1a0] sm:$0xff] %v1294
        %1359 = vst [vmem:[%s239 + $0x1a8] sm:$0xff] %v1295
        %1360 = vst [vmem:[%s239 + $0x1b0] sm:$0xff] %v1296
        %1361 = vst [vmem:[%s239 + $0x1b8] sm:$0xff] %v1297
        %1362 = vst [vmem:[%s239 + $0x1c0] sm:$0xff] %v1298
        %1363 = vst [vmem:[%s239 + $0x1c8] sm:$0xff] %v1299
        %1364 = vst [vmem:[%s239 + $0x1d0] sm:$0xff] %v1300
        %1365 = vst [vmem:[%s239 + $0x1d8] sm:$0xff] %v1301
        %1366 = vst [vmem:[%s239 + $0x1e0] sm:$0xff] %v1302
        %1367 = vst [vmem:[%s239 + $0x1e8] sm:$0xff] %v1303
        %1368 = vst [vmem:[%s239 + $0x1f0] sm:$0xff] %v1304
        %1369 = vst [vmem:[%s239 + $0x1f8] sm:$0xff] %v1305
      $region36: #{hetero_vertex_conv.1} parent=27 // pred_fallthru
        _
      %s1370 = smul.u32 16, %s32
      %p1371 = scmp.lt.s32.totalorder %s1370, 63
      %s1372 = scalar_select %p1371, %s1370, 63
      %s1373 = smul.addr %s1372, 4
      %s1374 = smul.addr %s1373, 8
      %s1375 = scalar_lea.vmem %s4, %s1374
      // Predicated region
      $region37: #{hetero_vertex_conv.1} parent=27 // pred_check
        %p1376 = pneg %p116
      $region38: #{hetero_vertex_conv.1} parent=27 // pred_check_branch
        %1378 = sbr.rel (%p1376) target = $region40
      $region39: #{hetero_vertex_conv.1} parent=27 // pred_region
        %s1379 = smul.u32 16, %s32
      $region40: #{hetero_vertex_conv.1} parent=27 // pred_fallthru
        _
    $region28: #{hetero_vertex_conv.1} parent=5 // pred_fallthru
      _
    %p1380 = scmp.le.s32.totalorder 2, %s23
    // Predicated region
    $region41: #{hetero_vertex_conv.1} parent=5 // pred_check
      %p1381 = pneg %p1380
    $region42: #{hetero_vertex_conv.1} parent=5 // pred_check_branch
      %1383 = sbr.rel (%p1381) target = $region44
    $region43: #{hetero_vertex_conv.1} parent=5 // pred_region
      %s1384 = ssub.s32 %s23, 2
      // Predicated region
      $region45: #{hetero_vertex_conv.1} parent=43 // pred_check
        %p1385 = pneg %p122
      $region46: #{hetero_vertex_conv.1} parent=43 // pred_check_branch
        %1387 = sbr.rel (%p1385) target = $region48
      $region47: #{hetero_vertex_conv.1} parent=43 // pred_region
        %s1388 = smul.u32 16, %s34
        %p1389 = scmp.lt.s32.totalorder %s1388, 63
        %s1390 = scalar_select %p1389, %s1388, 63
        %s1391 = smul.addr %s1390, 4
        %s1392 = smul.addr %s1391, 8
        %s1393 = scalar_lea.vmem %s4, %s1392
      $region48: #{hetero_vertex_conv.1} parent=43 // pred_fallthru
        _
    $region44: #{hetero_vertex_conv.1} parent=5 // pred_fallthru
      _
  $region6: #{hetero_vertex_conv.1} parent=0 // loop_footer
    %s27 = sadd.s32 1, %s23
  $region7: #{hetero_vertex_conv.1} parent=0 // loop_footer_branch
    %22 = sbr.rel target = $region3
  $region8: #{hetero_vertex_conv.1} parent=0 // loop_exit
    _

</llo_original>
